<compile_context>
chip_gen: v5e
topology: v5e:2x2
jax: 0.10.0
libtpu: 0.0.40
codegen_flags: <defaults>
</compile_context>

<pallas_src>
import jax
import jax.numpy as jnp
from jax import lax
from jax.experimental import pallas as pl
from jax.experimental.pallas import tpu as pltpu

LANE = 128
SUBLANE = 8  # f32 sublane count; accumulators are always (8, 128) f32.


def _sublane_multiple(dtype):
    """Native packed sublane multiple: f32 -> 8, bf16 -> 16, int8/bool -> 32."""
    itemsize = jnp.dtype(dtype).itemsize
    return SUBLANE * max(1, 4 // max(1, itemsize))


def _default_num_cores():
    """2 on v7x (2 TensorCores per chip share HBM), 1 on v5e/v6e."""
    # TODO(synk): if plain "parallel" does not shard the leading grid axis
    # across v7x's two TensorCores, switch that axis to pltpu.CORE_PARALLEL
    # (or pl.core_map over pltpu.create_tensorcore_mesh).
    try:
        kind = jax.devices()[0].device_kind.lower()
    except Exception:
        return 1
    return 2 if ("v7" in kind or "7x" in kind) else 1


def _make_kernel(rows, tile_rows, steps_per_core, tiles,
                 has_partial_tile, has_padded_steps):
    """Builds the kernel with static config baked in (closure, trace-time)."""
    n_full_tiles = tiles - 1 if has_partial_tile else tiles

    def kernel(t_ref, p_ref, m_ref, sum_ref, cnt_ref):
        c = pl.program_id(0)          # "core" (parallel) axis
        s = pl.program_id(1)          # streaming (arbitrary/reduction) axis

        # Per-core accumulator rows live in the outputs; init on first step.
        @pl.when(s == 0)
        def _():
            sum_ref[...] = jnp.zeros_like(sum_ref)
            cnt_ref[...] = jnp.zeros_like(cnt_ref)

        def accumulate(mask_rows):
            t = t_ref[...].astype(jnp.float32)
            p = p_ref[...].astype(jnp.float32)
            m = m_ref[...].astype(jnp.float32)
            t = t * m
            p = p * m
            valid = t > 0.0
            if mask_rows:
                # Only the boundary tile pays for the iota/compare row mask.
                tile_idx = c * steps_per_core + s
                row0 = tile_idx * tile_rows
                row_ids = row0 + lax.broadcasted_iota(jnp.int32, t.shape, 0)
                valid = jnp.logical_and(valid, row_ids < rows)
            safe_t = jnp.where(valid, t, 1.0)      # avoid div-by-zero
            ratio = jnp.where(valid, jnp.abs(t - p) / safe_t, 0.0)
            vcnt = valid.astype(jnp.float32)
            # Fold (tile_rows, 128) -> (8, 128) per-lane partial sums: pure
            # VPU adds (no XLU cross-lane reduce, no scalar dependency chain).
            sum_ref[...] += ratio.reshape(-1, SUBLANE, LANE).sum(axis=0)[None]
            cnt_ref[...] += vcnt.reshape(-1, SUBLANE, LANE).sum(axis=0)[None]

        if not (has_partial_tile or has_padded_steps):
            # Common case: every grid step is a full tile; no masking at all.
            accumulate(False)
        else:
            tile_idx = c * steps_per_core + s

            # Full tiles: unmasked hot path.
            @pl.when(tile_idx < n_full_tiles)
            def _():
                accumulate(False)

            if has_partial_tile:
                # Single boundary tile: masked path.
                @pl.when(tile_idx == tiles - 1)
                def _():
                    accumulate(True)
            # tile_idx >= tiles (clamped padded steps): skip accumulation.

    return kernel


def _tail_partials(t, p, m):
    """Tiny pure-JAX partials for the (< chunk) ragged tail."""
    t = t.astype(jnp.float32) * m.astype(jnp.float32)
    p = p.astype(jnp.float32) * m.astype(jnp.float32)
    valid = t > 0.0
    ratio = jnp.where(valid, jnp.abs(t - p) / jnp.where(valid, t, 1.0), 0.0)
    return jnp.sum(ratio), jnp.sum(valid.astype(jnp.float32))


def sparse_loss(target, pred, mask, *, tile_rows=2048, num_cores=None):
    """Masked relative-L1 loss, matching sparseLoss.forward.

    mask may be passed at a narrow dtype (int8 / bool / bf16) to cut streamed
    HBM bytes; the kernel upcasts in-place.
    """
    t = target.reshape(-1)
    p = pred.reshape(-1)
    m = mask.reshape(-1)
    n = t.shape[0]
    if n == 0:
        return jnp.float32(jnp.nan)  # torch.mean of empty tensor is NaN

    # Alignment chunk: packed sublane multiple of the widest-packing dtype.
    sub = max(_sublane_multiple(a.dtype) for a in (t, p, m))
    chunk = sub * LANE
    n_main = (n // chunk) * chunk          # chunk-aligned prefix for the kernel

    total_sum = jnp.float32(0.0)
    total_cnt = jnp.float32(0.0)

    if n_main > 0:
        rows = n_main // LANE              # multiple of `sub` by construction
        # Prefix views (whole arrays in the common case n % chunk == 0):
        # no full-array pad pass.
        t2 = (t if n_main == n else t[:n_main]).reshape(rows, LANE)
        p2 = (p if n_main == n else p[:n_main]).reshape(rows, LANE)
        m2 = (m if n_main == n else m[:n_main]).reshape(rows, LANE)

        # Tile sizing: multiple of the packed sublane count, <= rows.
        tr = max(sub, (int(tile_rows) // sub) * sub)
        tr = min(tr, rows)
        tiles = pl.cdiv(rows, tr)

        ncores = _default_num_cores() if num_cores is None else max(1, int(num_cores))
        ncores = min(ncores, tiles)
        steps_per_core = pl.cdiv(tiles, ncores)

        has_partial_tile = (rows % tr) != 0
        has_padded_steps = (ncores * steps_per_core) != tiles

        if has_padded_steps:
            def in_index_map(c, s):
                # Clamp padded grid steps to the last real tile; their
                # contribution is skipped in-kernel.
                return (jnp.minimum(c * steps_per_core + s, tiles - 1), 0)
        else:
            def in_index_map(c, s):
                return (c * steps_per_core + s, 0)

        in_spec = pl.BlockSpec((tr, LANE), in_index_map)
        out_spec = pl.BlockSpec((1, SUBLANE, LANE), lambda c, s: (c, 0, 0))

        kernel = _make_kernel(rows, tr, steps_per_core, tiles,
                              has_partial_tile, has_padded_steps)

        # 3 inputs x 2 pipeline buffers at their native dtypes + headroom.
        bytes_per_row = LANE * sum(jnp.dtype(a.dtype).itemsize
                                   for a in (t2, p2, m2))
        vmem_bytes = max(2 * tr * bytes_per_row + (4 << 20), 16 << 20)

        part_sum, part_cnt = pl.pallas_call(
            kernel,
            out_shape=(
                jax.ShapeDtypeStruct((ncores, SUBLANE, LANE), jnp.float32),
                jax.ShapeDtypeStruct((ncores, SUBLANE, LANE), jnp.float32),
            ),
            grid_spec=pltpu.PrefetchScalarGridSpec(
                num_scalar_prefetch=0,
                grid=(ncores, steps_per_core),
                in_specs=[in_spec, in_spec, in_spec],
                out_specs=[out_spec, out_spec],
            ),
            compiler_params=pltpu.CompilerParams(
                dimension_semantics=("parallel", "arbitrary"),
                vmem_limit_bytes=int(vmem_bytes),
            ),
        )(t2, p2, m2)
        total_sum = total_sum + jnp.sum(part_sum)
        total_cnt = total_cnt + jnp.sum(part_cnt)

    if n_main < n:
        # Ragged tail (< chunk elements): tiny jnp reduction, no extra pass
        # over the bulk of the data.
        ts, tc = _tail_partials(t[n_main:], p[n_main:], m[n_main:])
        total_sum = total_sum + ts
        total_cnt = total_cnt + tc

    # NaN (0/0) if no valid element, matching torch.mean of an empty tensor.
    return total_sum / total_cnt


def sparse_loss_ref(target, pred, mask):
    """Pure-JAX reference (f32 math, identical semantics)."""
    t = target.astype(jnp.float32) * mask.astype(jnp.float32)
    p = pred.astype(jnp.float32) * mask.astype(jnp.float32)
    valid = t > 0
    ratio = jnp.where(valid, jnp.abs(t - p) / jnp.where(valid, t, 1.0), 0.0)
    return jnp.sum(ratio) / jnp.sum(valid.astype(jnp.float32))


if __name__ == "__main__":
    key = jax.random.PRNGKey(0)
    k1, k2, k3 = jax.random.split(key, 3)

    # Test 1: small f32 NCHW (depth-style regression) — pure kernel path,
    # no tail, no masking (numel % 1024 == 0).
    B, C, H, W = 2, 4, 16, 16
    target = jax.random.uniform(k1, (B, C, H, W), jnp.float32, 0.0, 10.0)
    pred = jax.random.uniform(k2, (B, C, H, W), jnp.float32, 0.0, 10.0)
    mask = (jax.random.uniform(k3, (B, C, H, W)) > 0.5).astype(jnp.float32)
    loss = jax.block_until_ready(sparse_loss(target, pred, mask))
    ref = jax.block_until_ready(sparse_loss_ref(target, pred, mask))
    assert jnp.allclose(loss, ref, rtol=1e-5, atol=1e-6), (loss, ref)

    # Test 2: larger, non-divisible shape; narrow int8 mask streamed at
    # 1 B/elem; exercises the boundary-tile mask + jnp ragged-tail paths.
    B2, C2, H2, W2 = 3, 5, 33, 129
    t_big = jax.random.uniform(k1, (B2, C2, H2, W2), jnp.float32, 0.0, 10.0)
    p_big = jax.random.uniform(k2, (B2, C2, H2, W2), jnp.float32, 0.0, 10.0)
    m_big = (jax.random.uniform(k3, (B2, C2, H2, W2)) > 0.5).astype(jnp.int8)
    loss_big = jax.block_until_ready(
        sparse_loss(t_big, p_big, m_big, tile_rows=256))
    ref_big = jax.block_until_ready(sparse_loss_ref(t_big, p_big, m_big))
    assert jnp.allclose(loss_big, ref_big, rtol=1e-4, atol=1e-6), (loss_big, ref_big)

    # Test 3: bf16 target/pred (packed (16,128) tiles) + int8 mask
    # (packed (32,128) tiles) — dtype-aware tiling path.
    B3, C3, H3, W3 = 2, 8, 64, 64
    t_bf = jax.random.uniform(k1, (B3, C3, H3, W3), jnp.float32, 0.0, 10.0
                              ).astype(jnp.bfloat16)
    p_bf = jax.random.uniform(k2, (B3, C3, H3, W3), jnp.float32, 0.0, 10.0
                              ).astype(jnp.bfloat16)
    m_bf = (jax.random.uniform(k3, (B3, C3, H3, W3)) > 0.5).astype(jnp.int8)
    loss_bf = jax.block_until_ready(sparse_loss(t_bf, p_bf, m_bf))
    ref_bf = jax.block_until_ready(sparse_loss_ref(t_bf, p_bf, m_bf))
    assert jnp.allclose(loss_bf, ref_bf, rtol=1e-4, atol=1e-6), (loss_bf, ref_bf)

    print("KERNEL_OK")
</pallas_src>

<mosaic_0001>
module attributes {stable_mosaic.version = 11 : i64} {
  func.func @kernel(%arg0: i32, %arg1: i32, %arg2: memref<16x128xf32, #tpu.memory_space<vmem>>, %arg3: memref<16x128xf32, #tpu.memory_space<vmem>>, %arg4: memref<16x128xf32, #tpu.memory_space<vmem>>, %arg5: memref<1x8x128xf32, #tpu.memory_space<vmem>>, %arg6: memref<1x8x128xf32, #tpu.memory_space<vmem>>) attributes {dimension_semantics = [#tpu.dimension_semantics<parallel>, #tpu.dimension_semantics<arbitrary>], iteration_bounds = array<i64: 1, 1>, scalar_prefetch = 0 : i64, scratch_operands = 0 : i64, tpu.core_type = #tpu.core_type<tc>, window_params = [{transform_indices = @transform_0, window_bounds = array<i64: 16, 128>}, {transform_indices = @transform_1, window_bounds = array<i64: 16, 128>}, {transform_indices = @transform_2, window_bounds = array<i64: 16, 128>}, {transform_indices = @transform_3, window_bounds = array<i64: 1, 8, 128>}, {transform_indices = @transform_4, window_bounds = array<i64: 1, 8, 128>}]} {
    %c0_i32 = arith.constant 0 : i32
    %0 = arith.cmpi eq, %arg1, %c0_i32 : i32
    %1 = arith.extui %0 : i1 to i32
    %c0_i32_0 = arith.constant 0 : i32
    %2 = arith.cmpi ne, %1, %c0_i32_0 : i32
    scf.if %2 {
      %cst_22 = arith.constant 0.000000e+00 : f32
      %31 = vector.broadcast %cst_22 : f32 to vector<1x8x128xf32>
      %c0_23 = arith.constant 0 : index
      %c0_24 = arith.constant 0 : index
      %c0_25 = arith.constant 0 : index
      %32 = vector.load %arg5[%c0_23, %c0_24, %c0_25] : memref<1x8x128xf32, #tpu.memory_space<vmem>>, vector<1x8x128xf32>
      tpu.vector_store %arg5[%c0_23, %c0_24, %c0_25], %31 {strides = array<i32>} : memref<1x8x128xf32, #tpu.memory_space<vmem>>, vector<1x8x128xf32>,
      %cst_26 = arith.constant 0.000000e+00 : f32
      %33 = vector.broadcast %cst_26 : f32 to vector<1x8x128xf32>
      %c0_27 = arith.constant 0 : index
      %c0_28 = arith.constant 0 : index
      %c0_29 = arith.constant 0 : index
      %34 = vector.load %arg6[%c0_27, %c0_28, %c0_29] : memref<1x8x128xf32, #tpu.memory_space<vmem>>, vector<1x8x128xf32>
      tpu.vector_store %arg6[%c0_27, %c0_28, %c0_29], %33 {strides = array<i32>} : memref<1x8x128xf32, #tpu.memory_space<vmem>>, vector<1x8x128xf32>,
    } else {
    }
    %c0 = arith.constant 0 : index
    %c0_1 = arith.constant 0 : index
    %3 = vector.load %arg2[%c0, %c0_1] : memref<16x128xf32, #tpu.memory_space<vmem>>, vector<16x128xf32>
    %c0_2 = arith.constant 0 : index
    %c0_3 = arith.constant 0 : index
    %4 = vector.load %arg3[%c0_2, %c0_3] : memref<16x128xf32, #tpu.memory_space<vmem>>, vector<16x128xf32>
    %c0_4 = arith.constant 0 : index
    %c0_5 = arith.constant 0 : index
    %5 = vector.load %arg4[%c0_4, %c0_5] : memref<16x128xf32, #tpu.memory_space<vmem>>, vector<16x128xf32>
    %6 = arith.mulf %3, %5 : vector<16x128xf32>
    %7 = arith.mulf %4, %5 : vector<16x128xf32>
    %cst = arith.constant 0.000000e+00 : f32
    %8 = vector.broadcast %cst : f32 to vector<16x128xf32>
    %9 = arith.cmpf ogt, %6, %8 : vector<16x128xf32>
    %cst_6 = arith.constant 1.000000e+00 : f32
    %10 = vector.broadcast %cst_6 : f32 to vector<16x128xf32>
    %11 = arith.select %9, %6, %10 : vector<16x128xi1>, vector<16x128xf32>
    %12 = arith.subf %6, %7 : vector<16x128xf32>
    %13 = math.absf %12 : vector<16x128xf32>
    %14 = arith.divf %13, %11 : vector<16x128xf32>
    %cst_7 = arith.constant 0.000000e+00 : f32
    %15 = vector.broadcast %cst_7 : f32 to vector<16x128xf32>
    %16 = arith.select %9, %14, %15 : vector<16x128xi1>, vector<16x128xf32>
    %17 = arith.extui %9 : vector<16x128xi1> to vector<16x128xi32>
    %18 = arith.sitofp %17 : vector<16x128xi32> to vector<16x128xf32>
    %c0_8 = arith.constant 0 : index
    %c0_9 = arith.constant 0 : index
    %c0_10 = arith.constant 0 : index
    %19 = vector.load %arg5[%c0_8, %c0_9, %c0_10] : memref<1x8x128xf32, #tpu.memory_space<vmem>>, vector<1x8x128xf32>
    %20 = vector.shape_cast %16 : vector<16x128xf32> to vector<2x8x128xf32>
    %cst_11 = arith.constant dense<0.000000e+00> : vector<8x128xf32>
    %21 = vector.multi_reduction <add>, %20, %cst_11 [0] : vector<2x8x128xf32> to vector<8x128xf32>
    %22 = vector.shape_cast %21 : vector<8x128xf32> to vector<1x8x128xf32>
    %23 = arith.addf %19, %22 : vector<1x8x128xf32>
    %c0_12 = arith.constant 0 : index
    %c0_13 = arith.constant 0 : index
    %c0_14 = arith.constant 0 : index
    %24 = vector.load %arg5[%c0_12, %c0_13, %c0_14] : memref<1x8x128xf32, #tpu.memory_space<vmem>>, vector<1x8x128xf32>
    tpu.vector_store %arg5[%c0_12, %c0_13, %c0_14], %23 {strides = array<i32>} : memref<1x8x128xf32, #tpu.memory_space<vmem>>, vector<1x8x128xf32>,
    %c0_15 = arith.constant 0 : index
    %c0_16 = arith.constant 0 : index
    %c0_17 = arith.constant 0 : index
    %25 = vector.load %arg6[%c0_15, %c0_16, %c0_17] : memref<1x8x128xf32, #tpu.memory_space<vmem>>, vector<1x8x128xf32>
    %26 = vector.shape_cast %18 : vector<16x128xf32> to vector<2x8x128xf32>
    %cst_18 = arith.constant dense<0.000000e+00> : vector<8x128xf32>
    %27 = vector.multi_reduction <add>, %26, %cst_18 [0] : vector<2x8x128xf32> to vector<8x128xf32>
    %28 = vector.shape_cast %27 : vector<8x128xf32> to vector<1x8x128xf32>
    %29 = arith.addf %25, %28 : vector<1x8x128xf32>
    %c0_19 = arith.constant 0 : index
    %c0_20 = arith.constant 0 : index
    %c0_21 = arith.constant 0 : index
    %30 = vector.load %arg6[%c0_19, %c0_20, %c0_21] : memref<1x8x128xf32, #tpu.memory_space<vmem>>, vector<1x8x128xf32>
    tpu.vector_store %arg6[%c0_19, %c0_20, %c0_21], %29 {strides = array<i32>} : memref<1x8x128xf32, #tpu.memory_space<vmem>>, vector<1x8x128xf32>,
    return
  }
  func.func @transform_0(%arg0: i32, %arg1: i32) -> (i32, i32) {
    %c1_i32 = arith.constant 1 : i32
    %0 = arith.muli %arg0, %c1_i32 : i32
    %1 = arith.addi %0, %arg1 : i32
    %c0_i32 = arith.constant 0 : i32
    %c0_i32_0 = arith.constant 0 : i32
    return %1, %c0_i32 : i32, i32
  }
  func.func @transform_1(%arg0: i32, %arg1: i32) -> (i32, i32) {
    %c1_i32 = arith.constant 1 : i32
    %0 = arith.muli %arg0, %c1_i32 : i32
    %1 = arith.addi %0, %arg1 : i32
    %c0_i32 = arith.constant 0 : i32
    %c0_i32_0 = arith.constant 0 : i32
    return %1, %c0_i32 : i32, i32
  }
  func.func @transform_2(%arg0: i32, %arg1: i32) -> (i32, i32) {
    %c1_i32 = arith.constant 1 : i32
    %0 = arith.muli %arg0, %c1_i32 : i32
    %1 = arith.addi %0, %arg1 : i32
    %c0_i32 = arith.constant 0 : i32
    %c0_i32_0 = arith.constant 0 : i32
    return %1, %c0_i32 : i32, i32
  }
  func.func @transform_3(%arg0: i32, %arg1: i32) -> (i32, i32, i32) {
    %c0_i32 = arith.constant 0 : i32
    %c0_i32_0 = arith.constant 0 : i32
    %c0_i32_1 = arith.constant 0 : i32
    return %arg0, %c0_i32, %c0_i32_0 : i32, i32, i32
  }
  func.func @transform_4(%arg0: i32, %arg1: i32) -> (i32, i32, i32) {
    %c0_i32 = arith.constant 0 : i32
    %c0_i32_0 = arith.constant 0 : i32
    %c0_i32_1 = arith.constant 0 : i32
    return %arg0, %c0_i32, %c0_i32_0 : i32, i32, i32
  }
}

</mosaic_0001>

<llo_original>
// kernel: tpu_custom_call.1
$region0: #{tpu_custom_call.1}
  #allocation0 [shape = 'u32[]', space=smem, size = 0x4, offset = 0x4, fixed_abs, tag = 'smem constant byte address 0x4 - core index']
  #allocation1 [shape = 'u32[72,128]{1,0:T(1,128)}', space=vmem, size = 0x9000, scoped, tag = 'internal scratch']
  %s0 = inlined_call_operand.hbm [shape: f32[16,128], index: 0, kind: input, shape index: {}]
  %s1 = inlined_call_operand.hbm [shape: f32[16,128], index: 1, kind: input, shape index: {}]
  %s2 = inlined_call_operand.hbm [shape: f32[16,128], index: 2, kind: input, shape index: {}]
  %s3 = inlined_call_operand.hbm [shape: f32[1,8,128], index: 3, kind: output, shape index: {0}]
  %s4 = inlined_call_operand.hbm [shape: f32[1,8,128], index: 4, kind: output, shape index: {1}]
  %5 = xla_tuple %s3, %s4
  %s6 = sld [smem:[#allocation0]]
  $region46: #{tpu_custom_call.1} parent=0
    _
  %s8 = ssub.s32 1, %s6
  %s9 = scalar_select 0, %s8, %s6
  $region1: #{tpu_custom_call.1} parent=0
    #allocation2 [shape = 'u8[8192]{0}', space=vmem, size = 0x2000, scoped, tag = 'input window, operand 0, single buffered']
    #allocation3 [shape = 's32[1]{0}', space=sflag, size = 0x4, scoped, tag = 'scoped memory for tpu_custom_call.1']
    #allocation4 [shape = 's32[1]{0}', space=sflag, size = 0x4, scoped, tag = 'scoped memory for tpu_custom_call.1']
    #allocation5 [shape = 'u8[8192]{0}', space=vmem, size = 0x2000, scoped, tag = 'input window, operand 1, single buffered']
    #allocation6 [shape = 's32[1]{0}', space=sflag, size = 0x4, scoped, tag = 'scoped memory for tpu_custom_call.1']
    #allocation7 [shape = 'u8[8192]{0}', space=vmem, size = 0x2000, scoped, tag = 'input window, operand 2, single buffered']
    #allocation8 [shape = 'u8[4096]{0}', space=vmem, size = 0x1000, scoped, tag = 'output window, operand 0, single buffered']
    #allocation9 [shape = 'u8[4096]{0}', space=vmem, size = 0x1000, scoped, tag = 'output window, operand 1, single buffered']
    #allocation10 [shape = 's32[1]{0}', space=sflag, size = 0x4, scoped, tag = 'scoped memory for tpu_custom_call.1']
    %10 = vsyncpa [#allocation3], 0
    %11 = vsyncpa [#allocation6], 0
    %12 = vsyncpa [#allocation4], 0
    %13 = vsyncpa [#allocation10], 0
    // Predicated region
    $region2: #{tpu_custom_call.1} parent=1 // pred_check
      _
    $region3: #{tpu_custom_call.1} parent=1 // pred_check_branch
      %15 = sbr.rel (0) target = $region5
    $region4: #{tpu_custom_call.1} parent=1 // pred_region
      %s16 = sadd.s32 0, 0
      %s17 = smul.u32 2, %s16
      %19 = vsyncadd [#allocation3], 0
      %s20 = smul.addr %s17, 8
      %s21 = scalar_lea.hbm %s0, %s20
      %s22 = sshll.u32 %s21, 4
      %s23 = int_to_ptr.hbm [resolvable:$true] %s22
      %s24 = sshll.u32 [#allocation2], 4
      %s25 = int_to_ptr.vmem [resolvable:$true] %s24
      %30 = dma.hbm_to_vmem [thread:$0]  %s23, 256, %s25, [#allocation3], 128, 128, 8
    $region5: #{tpu_custom_call.1} parent=1 // pred_fallthru
      _
    // Predicated region
    $region6: #{tpu_custom_call.1} parent=1 // pred_check
      _
    $region7: #{tpu_custom_call.1} parent=1 // pred_check_branch
      %32 = sbr.rel (0) target = $region9
    $region8: #{tpu_custom_call.1} parent=1 // pred_region
      %s33 = sadd.s32 0, 0
      %s34 = smul.u32 2, %s33
      %36 = vsyncadd [#allocation6], 0
      %s37 = smul.addr %s34, 8
      %s38 = scalar_lea.hbm %s1, %s37
      %s39 = sshll.u32 %s38, 4
      %s40 = int_to_ptr.hbm [resolvable:$true] %s39
      %s41 = sshll.u32 [#allocation5], 4
      %s42 = int_to_ptr.vmem [resolvable:$true] %s41
      %47 = dma.hbm_to_vmem [thread:$0]  %s40, 256, %s42, [#allocation6], 128, 128, 8
    $region9: #{tpu_custom_call.1} parent=1 // pred_fallthru
      _
    // Predicated region
    $region10: #{tpu_custom_call.1} parent=1 // pred_check
      _
    $region11: #{tpu_custom_call.1} parent=1 // pred_check_branch
      %49 = sbr.rel (0) target = $region13
    $region12: #{tpu_custom_call.1} parent=1 // pred_region
      %s50 = sadd.s32 0, 0
      %s51 = smul.u32 2, %s50
      %53 = vsyncadd [#allocation6], 0
      %s54 = smul.addr %s51, 8
      %s55 = scalar_lea.hbm %s2, %s54
      %s56 = sshll.u32 %s55, 4
      %s57 = int_to_ptr.hbm [resolvable:$true] %s56
      %s58 = sshll.u32 [#allocation7], 4
      %s59 = int_to_ptr.vmem [resolvable:$true] %s58
      %64 = dma.hbm_to_vmem [thread:$0]  %s57, 256, %s59, [#allocation6], 128, 128, 8
    $region13: #{tpu_custom_call.1} parent=1 // pred_fallthru
      _
    // Predicated region
    $region14: #{tpu_custom_call.1} parent=1 // pred_check
      _
    $region15: #{tpu_custom_call.1} parent=1 // pred_check_branch
      %66 = sbr.rel (0) target = $region17
    $region16: #{tpu_custom_call.1} parent=1 // pred_region
      %68 = dma.done [#allocation3], 256
    $region17: #{tpu_custom_call.1} parent=1 // pred_fallthru
      _
    // Predicated region
    $region18: #{tpu_custom_call.1} parent=1 // pred_check
      _
    $region19: #{tpu_custom_call.1} parent=1 // pred_check_branch
      %70 = sbr.rel (0) target = $region21
    $region20: #{tpu_custom_call.1} parent=1 // pred_region
      %72 = dma.done [#allocation6], 256
    $region21: #{tpu_custom_call.1} parent=1 // pred_fallthru
      _
    // Predicated region
    $region22: #{tpu_custom_call.1} parent=1 // pred_check
      _
    $region23: #{tpu_custom_call.1} parent=1 // pred_check_branch
      %74 = sbr.rel (0) target = $region25
    $region24: #{tpu_custom_call.1} parent=1 // pred_region
      %76 = dma.done [#allocation6], 256
    $region25: #{tpu_custom_call.1} parent=1 // pred_fallthru
      _
    %s77 = sadd.s32 0, 0
    %s78 = smul.u32 2, %s77
    %s79 = sadd.s32 0, 0
    %s80 = smul.u32 2, %s79
    %s81 = sadd.s32 0, 0
    %s82 = smul.u32 2, %s81
    %p83 = scmp.eq.s32.totalorder 0, 0
    // Predicated region
    $region26: #{tpu_custom_call.1} parent=1 // pred_check
      %p84 = pneg %p83
    $region27: #{tpu_custom_call.1} parent=1 // pred_check_branch
      %86 = sbr.rel (%p84) target = $region29
    $region28: #{tpu_custom_call.1} parent=1 // pred_region
      %87 = vst [vmem:[#allocation8] sm:$0xff] 0.0
      %88 = vst [vmem:[#allocation9] sm:$0xff] 0.0
    $region29: #{tpu_custom_call.1} parent=1 // pred_fallthru
      _
    %v89 = vld [vmem:[#allocation2] sm:$0xff]
    %v90 = vld [vmem:[#allocation2 + $0x8] sm:$0xff]
    %v91 = vld [vmem:[#allocation5] sm:$0xff]
    %v92 = vld [vmem:[#allocation5 + $0x8] sm:$0xff]
    %v93 = vld [vmem:[#allocation7] sm:$0xff]
    %v94 = vld [vmem:[#allocation7 + $0x8] sm:$0xff]
    %v95 = vmul.f32 %v89, %v93
    %v96 = vmul.f32 %v90, %v94
    %v97 = vmul.f32 %v91, %v93
    %v98 = vmul.f32 %v92, %v94
    %vm99 = vcmp.gt.f32.partialorder %v95, 0.0
    %vm100 = vcmp.gt.f32.partialorder %v96, 0.0
    %v101 = vsel %vm99, %v95, 1.0
    %v102 = vsel %vm100, %v96, 1.0
    %v103 = vsub.f32 %v95, %v97
    %v104 = vsub.f32 %v96, %v98
    %v105 = vand.u32 2147483647, %v103
    %v106 = vand.u32 2147483647, %v104
    %v107 = vrcp.pop %v101
    %v108 = vmul.f32 %v101, %v107
    %v109 = vsub.f32 1.0, %v108
    %v110 = vmul.f32 %v107, %v109
    %v111 = vadd.f32 %v107, %v110
    %vm112 = vweird.f32 %v101
    %vm113 = vweird.f32 %v107
    %vm114 = vmor %vm112, %vm113
    %v115 = vsel %vm114, %v107, %v111
    %v116 = vand.u32 2147483647, %v101
    %vm117 = vcmp.eq.f32.partialorder %v116, 8.507059e+37
    %v118 = vand.u32 %v101, 2147483648
    %v119 = vor.u32 1.1754944e-38, %v118
    %v120 = vsel %vm117, %v119, %v115
    %v121 = vmul.f32 %v105, %v120
    %v122 = vrcp.pop %v102
    %v123 = vmul.f32 %v102, %v122
    %v124 = vsub.f32 1.0, %v123
    %v125 = vmul.f32 %v122, %v124
    %v126 = vadd.f32 %v122, %v125
    %vm127 = vweird.f32 %v102
    %vm128 = vweird.f32 %v122
    %vm129 = vmor %vm127, %vm128
    %v130 = vsel %vm129, %v122, %v126
    %v131 = vand.u32 2147483647, %v102
    %vm132 = vcmp.eq.f32.partialorder %v131, 8.507059e+37
    %v133 = vand.u32 %v102, 2147483648
    %v134 = vor.u32 1.1754944e-38, %v133
    %v135 = vsel %vm132, %v134, %v130
    %v136 = vmul.f32 %v106, %v135
    %v137 = vsel %vm99, %v121, 0.0
    %v138 = vsel %vm100, %v136, 0.0
    %v139 = vsel %vm99, 1, 0
    %v140 = vsel %vm100, 1, 0
    %v141 = vcvt.s32.f32 %v139
    %v142 = vcvt.s32.f32 %v140
    %v143 = vld [vmem:[#allocation8] sm:$0xff]
    %v144 = vadd.f32 %v137, %v138
    %v145 = vadd.f32 %v143, %v144
    %146 = vst [vmem:[#allocation8] sm:$0xff] %v145
    %v147 = vld [vmem:[#allocation9] sm:$0xff]
    %v148 = vadd.f32 %v141, %v142
    %v149 = vadd.f32 %v147, %v148
    %150 = vst [vmem:[#allocation9] sm:$0xff] %v149
    // Predicated region
    $region30: #{tpu_custom_call.1} parent=1 // pred_check
      _
    $region31: #{tpu_custom_call.1} parent=1 // pred_check_branch
      %152 = sbr.rel (0) target = $region33
    $region32: #{tpu_custom_call.1} parent=1 // pred_region
      %154 = vsyncadd [#allocation4], 0
      %s156 = sshll.u32 [#allocation8], 4
      %s157 = int_to_ptr.vmem [resolvable:$true] %s156
      %s158 = sshll.u32 %s3, 4
      %s159 = int_to_ptr.hbm [resolvable:$true] %s158
      %161 = dma.vmem_to_hbm [thread:$0]  %s157, 128, %s159, [#allocation4]
    $region33: #{tpu_custom_call.1} parent=1 // pred_fallthru
      _
    // Predicated region
    $region34: #{tpu_custom_call.1} parent=1 // pred_check
      _
    $region35: #{tpu_custom_call.1} parent=1 // pred_check_branch
      %163 = sbr.rel (0) target = $region37
    $region36: #{tpu_custom_call.1} parent=1 // pred_region
      %165 = vsyncadd [#allocation10], 0
      %s167 = sshll.u32 [#allocation9], 4
      %s168 = int_to_ptr.vmem [resolvable:$true] %s167
      %s169 = sshll.u32 %s4, 4
      %s170 = int_to_ptr.hbm [resolvable:$true] %s169
      %172 = dma.vmem_to_hbm [thread:$0]  %s168, 128, %s170, [#allocation10]
    $region37: #{tpu_custom_call.1} parent=1 // pred_fallthru
      _
    // Predicated region
    $region38: #{tpu_custom_call.1} parent=1 // pred_check
      _
    $region39: #{tpu_custom_call.1} parent=1 // pred_check_branch
      %174 = sbr.rel (0) target = $region41
    $region40: #{tpu_custom_call.1} parent=1 // pred_region
      %176 = dma.done [#allocation4], 128
    $region41: #{tpu_custom_call.1} parent=1 // pred_fallthru
      _
    // Predicated region
    $region42: #{tpu_custom_call.1} parent=1 // pred_check
      _
    $region43: #{tpu_custom_call.1} parent=1 // pred_check_branch
      %178 = sbr.rel (0) target = $region45
    $region44: #{tpu_custom_call.1} parent=1 // pred_region
      %180 = dma.done [#allocation10], 128
    $region45: #{tpu_custom_call.1} parent=1 // pred_fallthru
      _
    %181 = vsyncpa [#allocation3], 1
    %182 = vsyncpa [#allocation6], 1
    %183 = vsyncpa [#allocation4], 1
    %184 = vsyncpa [#allocation10], 1

</llo_original>
